<compile_context>
chip_gen: v6e
topology: v6e:2x2x1
jax: 0.10.0
libtpu: 0.0.40
codegen_flags: <defaults>
</compile_context>

<pallas_src>
import functools
import math

import jax
import jax.numpy as jnp
from jax.experimental import pallas as pl
from jax.experimental.pallas import tpu as pltpu


def encoder_kernel(x_ref, w_ref, b_ref, o_ref):
    # One fused affine per tile: (tb, 128) @ (128, 128) + (1, 128).
    y = jnp.dot(x_ref[...], w_ref[...], preferred_element_type=jnp.float32)
    o_ref[...] = (y + b_ref[...]).astype(o_ref.dtype)


@functools.partial(jax.jit, static_argnames=("block_rows",))
def encoder_forward(x, w1_t, b1, w2_t, b2, *, block_rows=512):
    """x: (B, 64) f32. w1_t: (64, 34), b1: (1, 34), w2_t: (34, 64), b2: (1, 64)."""
    B, D = x.shape                       # D = 64 (8*8 features)
    D2 = 2 * D                           # 128: lane-dense packed width

    # --- algebraic fusion of the two affine layers (done once, outside kernel)
    w_fused = jnp.dot(w1_t, w2_t, precision=jax.lax.Precision.HIGHEST)      # (64, 64)
    b_fused = jnp.dot(b1, w2_t, precision=jax.lax.Precision.HIGHEST) + b2   # (1, 64)

    # --- lane-dense packing: two batch rows per 128-lane vreg row ---
    w_bd = jnp.zeros((D2, D2), x.dtype)
    w_bd = w_bd.at[:D, :D].set(w_fused).at[D:, D:].set(w_fused)   # block-diagonal
    b_bd = jnp.concatenate([b_fused, b_fused], axis=1)            # (1, 128)

    # --- batch tiling: pad so the packed row count is a multiple of the tile
    rows = pl.cdiv(B, 2)                         # packed rows needed
    if rows <= block_rows:
        tb = max(8, ((rows + 7) // 8) * 8)       # single sublane-aligned tile
    else:
        tb = block_rows                          # 512 (multiple of 8)
    rows_pad = pl.cdiv(rows, tb) * tb
    b_pad = 2 * rows_pad

    x_p = x if b_pad == B else jnp.pad(x, ((0, b_pad - B), (0, 0)))
    x2 = x_p.reshape(rows_pad, D2)               # exact: row r = [x[2r] | x[2r+1]]

    grid = (rows_pad // tb,)
    y2 = pl.pallas_call(
        encoder_kernel,
        out_shape=jax.ShapeDtypeStruct((rows_pad, D2), x.dtype),
        grid_spec=pltpu.PrefetchScalarGridSpec(
            num_scalar_prefetch=0,
            grid=grid,
            in_specs=[
                pl.BlockSpec((tb, D2), lambda i: (i, 0)),   # x tile (double-buffered)
                pl.BlockSpec((D2, D2), lambda i: (0, 0)),   # fused W (VMEM-resident)
                pl.BlockSpec((1, D2), lambda i: (0, 0)),    # fused bias (VMEM-resident)
            ],
            out_specs=pl.BlockSpec((tb, D2), lambda i: (i, 0)),
        ),
        compiler_params=pltpu.CompilerParams(
            dimension_semantics=("parallel",),              # v7x: shard batch across TCs
        ),
    )(x2, w_bd, b_bd)

    return y2.reshape(b_pad, D)[:B]


def init_linear(key, in_features, out_features):
    """Deterministic init mimicking torch.nn.Linear defaults (uniform +-1/sqrt(fan_in)).
    Returns weight pre-transposed to (in_features, out_features) plus bias (1, out)."""
    kw, kb = jax.random.split(key)
    bound = 1.0 / math.sqrt(in_features)
    w_t = jax.random.uniform(kw, (in_features, out_features), jnp.float32,
                             minval=-bound, maxval=bound)
    b = jax.random.uniform(kb, (1, out_features), jnp.float32,
                           minval=-bound, maxval=bound)
    return w_t, b


if __name__ == "__main__":
    root = jax.random.PRNGKey(0)
    k_x, k1, k2, k3 = jax.random.split(root, 4)

    B = 16
    IN = 8 * 8      # 64
    HID = 34

    # Parameters (deterministic, in-script).
    w1_t, b1 = init_linear(k1, IN, HID)     # conv1: Linear(64, 34)
    w2_t, b2 = init_linear(k2, HID, IN)     # conv2: Linear(34, 64)
    w3_t, b3 = init_linear(k3, IN, 10)      # out:   Linear(64, 10) -- unused in forward

    # Example input: batch of flattened 8x8 patches.
    x = jax.random.normal(k_x, (B, IN), jnp.float32)

    y = encoder_forward(x, w1_t, b1, w2_t, b2)
    y = jax.block_until_ready(y)

    # Reference check: original two-layer semantics in plain JAX.
    # Tolerance allows for fused-vs-sequential rounding order and TPU default
    # matmul-precision differences between XLA and the in-kernel MXU dot.
    y_ref = (x @ w1_t + b1) @ w2_t + b2
    assert y.shape == (B, IN)
    err = float(jnp.max(jnp.abs(y - y_ref)))
    assert jnp.allclose(y, y_ref, atol=2e-3, rtol=2e-3), err

    print("KERNEL_OK")
</pallas_src>

<mosaic_0001>
module attributes {stable_mosaic.version = 11 : i64} {
  func.func @encoder_kernel(%arg0: i32, %arg1: memref<8x128xf32, #tpu.memory_space<vmem>>, %arg2: memref<128x128xf32, #tpu.memory_space<vmem>>, %arg3: memref<1x128xf32, #tpu.memory_space<vmem>>, %arg4: memref<8x128xf32, #tpu.memory_space<vmem>>) attributes {dimension_semantics = [#tpu.dimension_semantics<parallel>], iteration_bounds = array<i64: 1>, scalar_prefetch = 0 : i64, scratch_operands = 0 : i64, tpu.core_type = #tpu.core_type<tc>, window_params = [{transform_indices = @transform_0, window_bounds = array<i64: 8, 128>}, {pipeline_mode = #tpu.pipeline_mode<synchronous>, transform_indices = @transform_1, window_bounds = array<i64: 128, 128>}, {pipeline_mode = #tpu.pipeline_mode<synchronous>, transform_indices = @transform_2, window_bounds = array<i64: 1, 128>}, {transform_indices = @transform_3, window_bounds = array<i64: 8, 128>}]} {
    %c0 = arith.constant 0 : index
    %c0_0 = arith.constant 0 : index
    %0 = vector.load %arg1[%c0, %c0_0] : memref<8x128xf32, #tpu.memory_space<vmem>>, vector<8x128xf32>
    %c0_1 = arith.constant 0 : index
    %c0_2 = arith.constant 0 : index
    %1 = vector.load %arg2[%c0_1, %c0_2] : memref<128x128xf32, #tpu.memory_space<vmem>>, vector<128x128xf32>
    %cst = arith.constant dense<0.000000e+00> : vector<8x128xf32>
    %2 = tpu.matmul %0, %1, %cst {dimension_numbers = #tpu.dot_dimension_numbers<[1], [0], [0], [1], [0, 0, 1, 1], [], []>} : vector<8x128xf32>, vector<128x128xf32>, vector<8x128xf32> -> vector<8x128xf32>
    %c0_3 = arith.constant 0 : index
    %c0_4 = arith.constant 0 : index
    %3 = vector.load %arg3[%c0_3, %c0_4] : memref<1x128xf32, #tpu.memory_space<vmem>>, vector<1x128xf32>
    %4 = vector.broadcast %3 : vector<1x128xf32> to vector<8x128xf32>
    %5 = arith.addf %2, %4 : vector<8x128xf32>
    %c0_5 = arith.constant 0 : index
    %c0_6 = arith.constant 0 : index
    %6 = vector.load %arg4[%c0_5, %c0_6] : memref<8x128xf32, #tpu.memory_space<vmem>>, vector<8x128xf32>
    tpu.vector_store %arg4[%c0_5, %c0_6], %5 {strides = array<i32>} : memref<8x128xf32, #tpu.memory_space<vmem>>, vector<8x128xf32>,
    return
  }
  func.func @transform_0(%arg0: i32) -> (i32, i32) {
    %c0_i32 = arith.constant 0 : i32
    %c0_i32_0 = arith.constant 0 : i32
    return %arg0, %c0_i32 : i32, i32
  }
  func.func @transform_1(%arg0: i32) -> (i32, i32) {
    %c0_i32 = arith.constant 0 : i32
    %c0_i32_0 = arith.constant 0 : i32
    %c0_i32_1 = arith.constant 0 : i32
    return %c0_i32, %c0_i32_0 : i32, i32
  }
  func.func @transform_2(%arg0: i32) -> (i32, i32) {
    %c0_i32 = arith.constant 0 : i32
    %c0_i32_0 = arith.constant 0 : i32
    %c0_i32_1 = arith.constant 0 : i32
    return %c0_i32, %c0_i32_0 : i32, i32
  }
  func.func @transform_3(%arg0: i32) -> (i32, i32) {
    %c0_i32 = arith.constant 0 : i32
    %c0_i32_0 = arith.constant 0 : i32
    return %arg0, %c0_i32 : i32, i32
  }
}

</mosaic_0001>

<llo_original>
// kernel: encoder_forward.1
$region0: #{encoder_forward.1}
  #allocation0 [shape = 'u32[]', space=smem, size = 0x4, offset = 0x4, fixed_abs, tag = 'smem constant byte address 0x4 - core index']
  #allocation1 [shape = 'u32[144,128]{1,0:T(1,128)}', space=vmem, size = 0x12000, scoped, tag = 'internal scratch']
  %s0 = inlined_call_operand.vmem [shape: f32[8,128], index: 0, kind: input, shape index: {}]
  %s1 = inlined_call_operand.vmem [shape: f32[128,128], index: 1, kind: input, shape index: {}]
  %s2 = inlined_call_operand.vmem [shape: f32[1,128], index: 2, kind: input, shape index: {}]
  %s3 = inlined_call_operand.vmem [shape: f32[8,128], index: 3, kind: output, shape index: {}]
  %s4 = sld [smem:[#allocation0]]
  $region22: #{encoder_forward.1} parent=0
    _
  %s6 = ssub.s32 1, %s4
  %s7 = scalar_select 0, %s6, %s4
  // Predicated region
  $region2: #{encoder_forward.1} parent=0 // pred_check
    _
  $region3: #{encoder_forward.1} parent=0 // pred_check_branch
    %9 = sbr.rel (0) target = $region5
  $region4: #{encoder_forward.1} parent=0 // pred_region
    _
  $region5: #{encoder_forward.1} parent=0 // pred_fallthru
    _
  // Predicated region
  $region6: #{encoder_forward.1} parent=0 // pred_check
    _
  $region7: #{encoder_forward.1} parent=0 // pred_check_branch
    %11 = sbr.rel (0) target = $region9
  $region8: #{encoder_forward.1} parent=0 // pred_region
    _
  $region9: #{encoder_forward.1} parent=0 // pred_fallthru
    _
  // Predicated region
  $region10: #{encoder_forward.1} parent=0 // pred_check
    _
  $region11: #{encoder_forward.1} parent=0 // pred_check_branch
    %13 = sbr.rel (0) target = $region13
  $region12: #{encoder_forward.1} parent=0 // pred_region
    _
  $region13: #{encoder_forward.1} parent=0 // pred_fallthru
    _
  %v14 = vld [vmem:[%s0] sm:$0xff]
  %v15 = vld [vmem:[%s1] sm:$0xff]
  %v16 = vld [vmem:[%s1 + $0x8] sm:$0xff]
  %v17 = vld [vmem:[%s1 + $0x10] sm:$0xff]
  %v18 = vld [vmem:[%s1 + $0x18] sm:$0xff]
  %v19 = vld [vmem:[%s1 + $0x20] sm:$0xff]
  %v20 = vld [vmem:[%s1 + $0x28] sm:$0xff]
  %v21 = vld [vmem:[%s1 + $0x30] sm:$0xff]
  %v22 = vld [vmem:[%s1 + $0x38] sm:$0xff]
  %v23 = vld [vmem:[%s1 + $0x40] sm:$0xff]
  %v24 = vld [vmem:[%s1 + $0x48] sm:$0xff]
  %v25 = vld [vmem:[%s1 + $0x50] sm:$0xff]
  %v26 = vld [vmem:[%s1 + $0x58] sm:$0xff]
  %v27 = vld [vmem:[%s1 + $0x60] sm:$0xff]
  %v28 = vld [vmem:[%s1 + $0x68] sm:$0xff]
  %v29 = vld [vmem:[%s1 + $0x70] sm:$0xff]
  %v30 = vld [vmem:[%s1 + $0x78] sm:$0xff]
  %v31 = vld [vmem:[%s2] sm:$0x1]
  %v33 = vlaneseq
  %v34 = vshrl.u32 %v33, 7
  %v35 = vsub.s32 0, %v34
  %v36 = vrot.slane %v31, %v35
  %38 = vmatprep.subr.mxu0 0.0
  %39 = vmatpush1.msra.mxu0 %v30
  %40 = vmatprep.subr.mxu0 0.0
  %41 = vmatpush1.msra.mxu0 %v29
  %42 = vmatprep.subr.mxu0 0.0
  %43 = vmatpush1.msra.mxu0 %v28
  %44 = vmatprep.subr.mxu0 0.0
  %45 = vmatpush1.msra.mxu0 %v27
  %46 = vmatprep.subr.mxu0 0.0
  %47 = vmatpush1.msra.mxu0 %v26
  %48 = vmatprep.subr.mxu0 0.0
  %49 = vmatpush1.msra.mxu0 %v25
  %50 = vmatprep.subr.mxu0 0.0
  %51 = vmatpush1.msra.mxu0 %v24
  %52 = vmatprep.subr.mxu0 0.0
  %53 = vmatpush1.msra.mxu0 %v23
  %54 = vmatprep.subr.mxu0 0.0
  %55 = vmatpush1.msra.mxu0 %v22
  %56 = vmatprep.subr.mxu0 0.0
  %57 = vmatpush1.msra.mxu0 %v21
  %58 = vmatprep.subr.mxu0 0.0
  %59 = vmatpush1.msra.mxu0 %v20
  %60 = vmatprep.subr.mxu0 0.0
  %61 = vmatpush1.msra.mxu0 %v19
  %62 = vmatprep.subr.mxu0 0.0
  %63 = vmatpush1.msra.mxu0 %v18
  %64 = vmatprep.subr.mxu0 0.0
  %65 = vmatpush1.msra.mxu0 %v17
  %66 = vmatprep.subr.mxu0 0.0
  %67 = vmatpush1.msra.mxu0 %v16
  %68 = vmatprep.subr.mxu0 0.0
  %69 = vmatpush1.msra.mxu0 %v15
  %70 = vmatprep.subr.mxu0 0.0
  %71 = vmatpush2.msra.mxu0 0.0
  %72 = vmatprep.subr.mxu0 0.0
  %73 = vmatpush2.msra.mxu0 0.0
  %74 = vmatprep.subr.mxu0 0.0
  %75 = vmatpush2.msra.mxu0 0.0
  %76 = vmatprep.subr.mxu0 0.0
  %77 = vmatpush2.msra.mxu0 0.0
  %78 = vmatprep.subr.mxu0 0.0
  %79 = vmatpush2.msra.mxu0 0.0
  %80 = vmatprep.subr.mxu0 0.0
  %81 = vmatpush2.msra.mxu0 0.0
  %82 = vmatprep.subr.mxu0 0.0
  %83 = vmatpush2.msra.mxu0 0.0
  %84 = vmatprep.subr.mxu0 0.0
  %85 = vmatpush2.msra.mxu0 0.0
  %86 = vmatprep.subr.mxu0 0.0
  %87 = vmatpush2.msra.mxu0 0.0
  %88 = vmatprep.subr.mxu0 0.0
  %89 = vmatpush2.msra.mxu0 0.0
  %90 = vmatprep.subr.mxu0 0.0
  %91 = vmatpush2.msra.mxu0 0.0
  %92 = vmatprep.subr.mxu0 0.0
  %93 = vmatpush2.msra.mxu0 0.0
  %94 = vmatprep.subr.mxu0 0.0
  %95 = vmatpush2.msra.mxu0 0.0
  %96 = vmatprep.subr.mxu0 0.0
  %97 = vmatpush2.msra.mxu0 0.0
  %98 = vmatprep.subr.mxu0 0.0
  %99 = vmatpush2.msra.mxu0 0.0
  %100 = vmatprep.subr.mxu0 0.0
  %101 = vmatpush2.msra.mxu0 0.0
  %102 = vmatprep.mubr.f32.mxu0 0.0
  %103 = vmatmul.mubr.f32.gmra.mxu0 %v14
  %v104 = vpop.f32.mrf.mxu0
  %v105 = vadd.f32 %v36, %v104
  %v106 = vpop.f32.mrf.mxu0
  %107 = vdwg.mxu0
  %108 = vst [vmem:[%s3] sm:$0xff] %v105
  // Predicated region
  $region14: #{encoder_forward.1} parent=0 // pred_check
    _
  $region15: #{encoder_forward.1} parent=0 // pred_check_branch
    %110 = sbr.rel (0) target = $region17
  $region16: #{encoder_forward.1} parent=0 // pred_region
    _
  $region17: #{encoder_forward.1} parent=0 // pred_fallthru
    _
  // Predicated region
  $region18: #{encoder_forward.1} parent=0 // pred_check
    _
  $region19: #{encoder_forward.1} parent=0 // pred_check_branch
    %112 = sbr.rel (0) target = $region21
  $region20: #{encoder_forward.1} parent=0 // pred_region
    _
  $region21: #{encoder_forward.1} parent=0 // pred_fallthru
    _

</llo_original>
